<compile_context>
chip_gen: v7x
topology: tpu7x:2x2x1
jax: 0.10.0
libtpu: 0.0.40
codegen_flags: <defaults>
</compile_context>

<pallas_src>
import jax
import jax.numpy as jnp
from jax.experimental import pallas as pl
from jax.experimental.pallas import tpu as pltpu


def _round_up(x, m):
    return (x + m - 1) // m * m


def _score_kernel(x_ref, w_ref, m_ref, b_ref, o_ref):
    """Score one tile of rows: o = w . x^T + b + log(mask), -inf where mask==0.

    x_ref : (TR, E)     span-embedding row tile (native dtype); the trailing
                        grid step may read past the real rows -- those lanes
                        are killed by the mask below.
    w_ref : (1, E)      scorer weight, lane-dense, resident across the grid
    m_ref : (1, 1, TR)  span mask tile (f32), span axis on lanes
    b_ref : (1,)        scorer bias, SMEM scalar
    o_ref : (1, 1, TR)  masked span scores (f32), span axis on lanes
    """
    x = x_ref[...]                                   # (TR, E), native dtype
    w = w_ref[...]                                   # (1, E)
    # Lane-dense MXU orientation: contract on E, output dim is the span axis.
    scores = jax.lax.dot_general(
        w, x,
        dimension_numbers=(((1,), (1,)), ((), ())),
        preferred_element_type=jnp.float32)          # (1, TR), f32 accumulate
    scores = scores + b_ref[0]                       # scalar bias from SMEM
    mask = m_ref[0]                                  # (1, TR), f32
    # Exact reference semantics (scores + log(mask)); the where kills mask==0
    # lanes and any garbage read from the partial trailing row tile.
    o_ref[0] = jnp.where(mask > 0.0, scores + jnp.log(mask),
                         jnp.float32(-jnp.inf))


def _pick_row_tile(R, E, itemsize, vmem_budget_bytes):
    """Rows per grid step (see header for the sizing rationale)."""
    sub = max(8, 32 // itemsize)      # sublane packing: 8 f32, 16 bf16, 32 i8
    lane = 256                        # lane-dense score slab / MXU N tile
    if R <= sub:
        return R                      # single block, full-dim on both axes
    # Upper bound: double-buffered (TR, E) input tile must fit the VMEM budget
    # (safe on v7x's 64 MiB physical VMEM); never more than 4096 rows.
    cap_rows = vmem_budget_bytes // (2 * E * itemsize)
    cap = min(4096, max(sub, cap_rows // sub * sub))
    # Target: big enough to amortize the ~0.35 us per-step overhead, but keep
    # >= ~8 grid steps so ("parallel",) load-balances v7x's two TensorCores.
    target = _round_up(max(lane, pl.cdiv(R, 8)), lane)
    TR = min(cap, target)
    # Never tile wider than the rows we actually have.
    TR = min(TR, (R // sub) * sub)
    return max(sub, TR)


def score_spans(span_embeddings, span_mask, w, b, *, vmem_budget_bytes=20 << 20):
    """Masked span scores of shape (B, N) float32, computed in Pallas."""
    B, N, E = span_embeddings.shape
    dt = span_embeddings.dtype
    itemsize = jnp.dtype(dt).itemsize
    R = B * N

    TR = _pick_row_tile(R, E, itemsize, vmem_budget_bytes)
    G = pl.cdiv(R, TR)
    R_pad = G * TR

    # Embeddings are NOT padded (no extra read+write pass over HBM); the last
    # partial row tile is handled in-kernel.  Only the tiny 1-D mask is padded.
    x = span_embeddings.reshape(R, E)                 # native dtype, no f32 cast
    mask_f = span_mask.astype(jnp.float32).reshape(R)
    if R_pad != R:
        mask_f = jnp.pad(mask_f, (0, R_pad - R))      # padded rows -> -inf
    mask3 = mask_f.reshape(G, 1, TR)                  # lane-dense mask tiles

    w_row = w.reshape(1, E).astype(dt)                # lane-dense weight
    b1 = b.reshape(1).astype(jnp.float32)             # scalar bias -> SMEM

    # Explicit scoped-VMEM limit from the actual working set: v5e's default is
    # only 16 MiB, and v7x has just 64 MiB physical, so stay well below that.
    x_tile_bytes = TR * E * itemsize
    lane_tile_bytes = TR * 4 * 2                      # f32 mask + f32 scores
    need = 2 * (x_tile_bytes + lane_tile_bytes) + 2 * E * itemsize + (1 << 20)
    vmem_limit = int(min(max(need * 3 // 2, 16 << 20), 40 << 20))

    scores = pl.pallas_call(
        _score_kernel,
        out_shape=jax.ShapeDtypeStruct((G, 1, TR), jnp.float32),
        grid_spec=pltpu.PrefetchScalarGridSpec(
            num_scalar_prefetch=0,
            grid=(G,),
            in_specs=[
                pl.BlockSpec((TR, E), lambda i: (i, 0)),        # embeddings tile
                pl.BlockSpec((1, E), lambda i: (0, 0)),         # weight (resident)
                pl.BlockSpec((1, 1, TR), lambda i: (i, 0, 0)),  # mask tile
                pl.BlockSpec(memory_space=pltpu.MemorySpace.SMEM),  # bias scalar
            ],
            out_specs=pl.BlockSpec((1, 1, TR), lambda i: (i, 0, 0)),
        ),
        compiler_params=pltpu.CompilerParams(
            dimension_semantics=("parallel",),
            vmem_limit_bytes=vmem_limit),
    )(x, w_row, mask3, b1)

    return scores.reshape(R_pad)[:R].reshape(B, N)


def span_pruner_forward(span_embeddings, span_mask, num_spans_to_keep, w, b):
    """Mirror of SpanPruner.forward.

    Returns:
      top_span_embeddings : (B, k, E) native dtype
      top_span_mask       : (B, k)    float32
      top_span_indices    : (B, k)    int32   (sorted, original order)
      top_span_scores     : (B, k, 1) float32
    """
    B, N, E = span_embeddings.shape

    # span_scores = scorer(span_embeddings) + log-mask   -- Pallas kernel
    span_scores = score_spans(span_embeddings, span_mask, w, b)        # (B, N)

    # TODO(synk): top-k / sort / batched gather are data-dependent; kept in
    # plain JAX (lax.top_k, jnp.sort, jnp.take_along_axis).
    _, top_idx = jax.lax.top_k(span_scores, num_spans_to_keep)         # (B, k)
    top_idx = jnp.sort(top_idx, axis=1).astype(jnp.int32)              # (B, k)

    # TODO(synk): optional scalar-prefetch DMA row-gather kernel for top_emb
    # (worth it only when k*E is large); plain take_along_axis for now.
    idx3 = top_idx[:, :, None]                                         # (B, k, 1)
    top_emb = jnp.take_along_axis(span_embeddings, idx3, axis=1)       # (B, k, E)
    top_mask = jnp.take_along_axis(
        span_mask.astype(jnp.float32), top_idx, axis=1)                # (B, k)
    top_scores = jnp.take_along_axis(span_scores, top_idx, axis=1)[..., None]

    return top_emb, top_mask, top_idx, top_scores


if __name__ == "__main__":
    B, N, E = 2, 9, 32            # R = 18: exercises the partial trailing tile
    num_spans_to_keep = 4

    key = jax.random.PRNGKey(0)
    k_emb, k_w, k_b = jax.random.split(key, 3)

    span_embeddings = jax.random.normal(k_emb, (B, N, E), dtype=jnp.float32)

    # valid lengths per batch: [9, 6]  -> mask of 1s then 0s
    lengths = jnp.array([9, 6], dtype=jnp.int32)
    span_mask = (jnp.arange(N)[None, :] < lengths[:, None]).astype(jnp.float32)

    # deterministic scorer parameters (Linear E -> 1)
    w = jax.random.normal(k_w, (E, 1), dtype=jnp.float32) * 0.1
    b = jax.random.normal(k_b, (1,), dtype=jnp.float32) * 0.1

    outs = span_pruner_forward(span_embeddings, span_mask, num_spans_to_keep, w, b)
    outs = jax.block_until_ready(outs)

    top_emb, top_mask, top_idx, top_scores = outs
    assert top_emb.shape == (B, num_spans_to_keep, E)
    assert top_mask.shape == (B, num_spans_to_keep)
    assert top_idx.shape == (B, num_spans_to_keep)
    assert top_scores.shape == (B, num_spans_to_keep, 1)
    # indices must be sorted (original order preserved)
    assert bool(jnp.all(top_idx[:, 1:] >= top_idx[:, :-1]))

    # correctness check of the Pallas scoring step against a pure-JAX reference
    kernel_scores = jax.block_until_ready(
        score_spans(span_embeddings, span_mask, w, b))                  # (B, N)
    ref_scores = jnp.einsum("bne,eo->bn", span_embeddings, w) + b[0]
    valid = span_mask > 0
    assert bool(jnp.allclose(jnp.where(valid, kernel_scores, 0.0),
                             jnp.where(valid, ref_scores, 0.0),
                             atol=1e-4, rtol=1e-4))
    assert bool(jnp.all(jnp.isneginf(jnp.where(valid, -jnp.inf, kernel_scores))))

    print("KERNEL_OK")
</pallas_src>

<mosaic_0001>
module attributes {stable_mosaic.version = 11 : i64} {
  func.func @_score_kernel(%arg0: i32, %arg1: memref<16x32xf32, #tpu.memory_space<vmem>>, %arg2: memref<1x32xf32, #tpu.memory_space<vmem>>, %arg3: memref<1x1x16xf32, #tpu.memory_space<vmem>>, %arg4: memref<1xf32, #tpu.memory_space<smem>>, %arg5: memref<1x1x16xf32, #tpu.memory_space<vmem>>) attributes {dimension_semantics = [#tpu.dimension_semantics<parallel>], iteration_bounds = array<i64: 2>, scalar_prefetch = 0 : i64, scratch_operands = 0 : i64, tpu.core_type = #tpu.core_type<tc>, window_params = [{transform_indices = @transform_0, window_bounds = array<i64: 16, 32>}, {pipeline_mode = #tpu.pipeline_mode<synchronous>, transform_indices = @transform_1, window_bounds = array<i64: 1, 32>}, {transform_indices = @transform_2, window_bounds = array<i64: 1, 1, 16>}, {transform_indices = @transform_3, window_bounds = array<i64: 1>}, {transform_indices = @transform_4, window_bounds = array<i64: 1, 1, 16>}]} {
    %c0 = arith.constant 0 : index
    %c0_0 = arith.constant 0 : index
    %0 = vector.load %arg1[%c0, %c0_0] : memref<16x32xf32, #tpu.memory_space<vmem>>, vector<16x32xf32>
    %c0_1 = arith.constant 0 : index
    %c0_2 = arith.constant 0 : index
    %1 = vector.load %arg2[%c0_1, %c0_2] : memref<1x32xf32, #tpu.memory_space<vmem>>, vector<1x32xf32>
    %cst = arith.constant dense<0.000000e+00> : vector<1x16xf32>
    %2 = tpu.matmul %1, %0, %cst {dimension_numbers = #tpu.dot_dimension_numbers<[1], [1], [0], [0], [0, 0, 1, 0], [], []>} : vector<1x32xf32>, vector<16x32xf32>, vector<1x16xf32> -> vector<1x16xf32>
    %c0_3 = arith.constant 0 : index
    %3 = memref.load %arg4[%c0_3] : memref<1xf32, #tpu.memory_space<smem>>
    %4 = vector.broadcast %3 : f32 to vector<1x16xf32>
    %5 = arith.addf %2, %4 : vector<1x16xf32>
    %c0_4 = arith.constant 0 : index
    %c0_5 = arith.constant 0 : index
    %c0_6 = arith.constant 0 : index
    %6 = vector.load %arg3[%c0_4, %c0_5, %c0_6] : memref<1x1x16xf32, #tpu.memory_space<vmem>>, vector<1x1x16xf32>
    %7 = vector.shape_cast %6 : vector<1x1x16xf32> to vector<1x16xf32>
    %cst_7 = arith.constant 0.000000e+00 : f32
    %8 = vector.broadcast %cst_7 : f32 to vector<1x16xf32>
    %9 = arith.cmpf ogt, %7, %8 : vector<1x16xf32>
    %10 = math.log %7 : vector<1x16xf32>
    %11 = arith.addf %5, %10 : vector<1x16xf32>
    %cst_8 = arith.constant 0xFF800000 : f32
    %12 = vector.broadcast %cst_8 : f32 to vector<1x16xf32>
    %13 = arith.select %9, %11, %12 : vector<1x16xi1>, vector<1x16xf32>
    %c0_9 = arith.constant 0 : index
    %c0_10 = arith.constant 0 : index
    %c0_11 = arith.constant 0 : index
    %14 = vector.load %arg5[%c0_9, %c0_10, %c0_11] : memref<1x1x16xf32, #tpu.memory_space<vmem>>, vector<1x1x16xf32>
    %15 = vector.shape_cast %14 : vector<1x1x16xf32> to vector<1x16xf32>
    %16 = vector.shape_cast %13 : vector<1x16xf32> to vector<1x1x16xf32>
    tpu.vector_store %arg5[%c0_9, %c0_10, %c0_11], %16 {strides = array<i32>} : memref<1x1x16xf32, #tpu.memory_space<vmem>>, vector<1x1x16xf32>,
    return
  }
  func.func @transform_0(%arg0: i32) -> (i32, i32) {
    %c0_i32 = arith.constant 0 : i32
    %c0_i32_0 = arith.constant 0 : i32
    return %arg0, %c0_i32 : i32, i32
  }
  func.func @transform_1(%arg0: i32) -> (i32, i32) {
    %c0_i32 = arith.constant 0 : i32
    %c0_i32_0 = arith.constant 0 : i32
    %c0_i32_1 = arith.constant 0 : i32
    return %c0_i32, %c0_i32_0 : i32, i32
  }
  func.func @transform_2(%arg0: i32) -> (i32, i32, i32) {
    %c0_i32 = arith.constant 0 : i32
    %c0_i32_0 = arith.constant 0 : i32
    %c0_i32_1 = arith.constant 0 : i32
    return %arg0, %c0_i32, %c0_i32_0 : i32, i32, i32
  }
  func.func @transform_3(%arg0: i32) -> i32 {
    %c0_i32 = arith.constant 0 : i32
    %c0_i32_0 = arith.constant 0 : i32
    return %c0_i32 : i32
  }
  func.func @transform_4(%arg0: i32) -> (i32, i32, i32) {
    %c0_i32 = arith.constant 0 : i32
    %c0_i32_0 = arith.constant 0 : i32
    %c0_i32_1 = arith.constant 0 : i32
    return %arg0, %c0_i32, %c0_i32_0 : i32, i32, i32
  }
}

</mosaic_0001>

<llo_original>
// kernel: tpu_custom_call.1
$region0: #{tpu_custom_call.1}
  #allocation0 [shape = 'u32[]', space=smem, size = 0x4, offset = 0x4, fixed_abs, tag = 'smem constant byte address 0x4 - core index']
  #allocation1 [shape = 'u32[144,128]{1,0:T(1,128)}', space=vmem, size = 0x12000, scoped, tag = 'internal scratch']
  #allocation2 [shape = 'f32[1]{0:T(128)S(6)}', space=smem, size = 0x200, scoped, tag = 'scoped memory for tpu_custom_call.1']
  %s0 = inlined_call_operand.hbm [shape: f32[18,32], index: 0, kind: input, shape index: {}]
  %s1 = inlined_call_operand.vmem [shape: f32[1,32], index: 1, kind: input, shape index: {}]
  %s2 = inlined_call_operand.vmem [shape: f32[2,1,16], index: 2, kind: input, shape index: {}]
  %s3 = inlined_call_operand.<no memory space> [shape: f32[1], index: 3, kind: input, shape index: {}]
  %s4 = inlined_call_operand.hbm [shape: f32[2,1,16], index: 4, kind: output, shape index: {}]
  %s5 = sld [smem:[#allocation0]]
  $region53: #{tpu_custom_call.1} parent=0
    _
  %s7 = ssub.s32 1, %s5
  %s8 = scalar_select 0, %s7, %s5
  %9 = sst [smem:[#allocation2]] %s3
  $region1: #{tpu_custom_call.1} parent=0
    #allocation3 [shape = 'u8[16384]{0}', space=vmem, size = 0x4000, scoped, tag = 'input window, operand 0']
    #allocation4 [shape = 's32[2]{0}', space=sflag, size = 0x8, scoped, tag = 'scoped memory for tpu_custom_call.1']
    #allocation5 [shape = 's32[2]{0}', space=sflag, size = 0x8, scoped, tag = 'scoped memory for tpu_custom_call.1']
    #allocation6 [shape = 'u8[1024]{0}', space=vmem, size = 0x400, scoped, tag = 'output window, operand 0']
    %10 = vsyncpa [#allocation4], 0
    %s11 = scalar_lea.sflag [#allocation4], 1
    %12 = vsyncpa %s11, 0
    %13 = vsyncpa [#allocation5], 0
    %s14 = scalar_lea.sflag [#allocation5], 1
    %15 = vsyncpa %s14, 0
    loop: start=0, step=1, limit=4
    $region2: #{tpu_custom_call.1} parent=1 // loop_pre_header
      _
    $region3: #{tpu_custom_call.1} parent=1 // loop_header
      %s17 = sphi 0, %s21
      %p18 = scmp.ge.s32.totalorder %s17, 4
      %s27 = sphi 0, %s29
      %s30 = sphi 0, %s27
      %s31 = sphi 0, %s30
      %s47 = sphi 0, %s31
      %s51 = sphi 0, %s51
      %s53 = sphi 0, %s51
      %s54 = sphi 0, %s53
      %s68 = sphi 0, %s54
      %s74 = sphi 0, %s76
      %s77 = sphi 0, %s74
      %s78 = sphi 0, %s77
      %s94 = sphi 0, %s78
      %s98 = sphi 0, %s98
      %s100 = sphi 0, %s98
      %s101 = sphi 0, %s100
      %s115 = sphi 0, %s101
      %s121 = sphi 0, %s123
      %s124 = sphi 0, %s121
      %s125 = sphi 0, %s124
      %s141 = sphi 0, %s125
    $region4: #{tpu_custom_call.1} parent=1 // loop_header_branch
      %20 = sbr.rel (%p18) target = $region8
    $region5: #{tpu_custom_call.1} parent=1 // loop_body
      %s22 = ssub.s32 %s17, 1
      %s23 = ssub.s32 %s17, 2
      %s24 = sadd.s32 %s17, 1
      %s25 = ssub.s32 %s17, %s24
      %p26 = scmp.eq.s32.totalorder %s25, 0
      %s28 = sadd.s32 %s27, 1
      %s29 = scalar_select %p26, %s27, %s28
      %p32 = pneg %p26
      %p33 = scmp.eq.s32.totalorder %s17, 1
      %p34 = por %p32, %p33
      %p35 = scmp.ne.s32.totalorder %s27, %s30
      %p36 = scmp.eq.s32.totalorder %s17, 0
      %p37 = por %p35, %p36
      %p38 = scmp.ne.s32.totalorder %s27, %s30
      %p39 = scmp.eq.s32.totalorder %s22, 1
      %p40 = por %p38, %p39
      %p41 = scmp.ne.s32.totalorder %s30, %s31
      %p42 = scmp.eq.s32.totalorder %s22, 0
      %p43 = por %p41, %p42
      %p44 = scmp.ne.s32.totalorder %s30, %s31
      %p45 = scmp.eq.s32.totalorder %s23, 1
      %p46 = por %p44, %p45
      %p48 = scmp.ne.s32.totalorder %s31, %s47
      %p49 = scmp.eq.s32.totalorder %s23, 0
      %p50 = por %p48, %p49
      %s52 = sadd.s32 %s51, 1
      %p55 = scmp.eq.s32.totalorder %s17, 1
      %p56 = scmp.ne.s32.totalorder %s51, %s53
      %p57 = scmp.eq.s32.totalorder %s17, 0
      %p58 = por %p56, %p57
      %p59 = scmp.ne.s32.totalorder %s51, %s53
      %p60 = scmp.eq.s32.totalorder %s22, 1
      %p61 = por %p59, %p60
      %p62 = scmp.ne.s32.totalorder %s53, %s54
      %p63 = scmp.eq.s32.totalorder %s22, 0
      %p64 = por %p62, %p63
      %p65 = scmp.ne.s32.totalorder %s53, %s54
      %p66 = scmp.eq.s32.totalorder %s23, 1
      %p67 = por %p65, %p66
      %p69 = scmp.ne.s32.totalorder %s54, %s68
      %p70 = scmp.eq.s32.totalorder %s23, 0
      %p71 = por %p69, %p70
      %s72 = ssub.s32 %s17, %s24
      %p73 = scmp.eq.s32.totalorder %s72, 0
      %s75 = sadd.s32 %s74, 1
      %s76 = scalar_select %p73, %s74, %s75
      %p79 = pneg %p73
      %p80 = scmp.eq.s32.totalorder %s17, 1
      %p81 = por %p79, %p80
      %p82 = scmp.ne.s32.totalorder %s74, %s77
      %p83 = scmp.eq.s32.totalorder %s17, 0
      %p84 = por %p82, %p83
      %p85 = scmp.ne.s32.totalorder %s74, %s77
      %p86 = scmp.eq.s32.totalorder %s22, 1
      %p87 = por %p85, %p86
      %p88 = scmp.ne.s32.totalorder %s77, %s78
      %p89 = scmp.eq.s32.totalorder %s22, 0
      %p90 = por %p88, %p89
      %p91 = scmp.ne.s32.totalorder %s77, %s78
      %p92 = scmp.eq.s32.totalorder %s23, 1
      %p93 = por %p91, %p92
      %p95 = scmp.ne.s32.totalorder %s78, %s94
      %p96 = scmp.eq.s32.totalorder %s23, 0
      %p97 = por %p95, %p96
      %s99 = sadd.s32 %s98, 1
      %p102 = scmp.eq.s32.totalorder %s17, 1
      %p103 = scmp.ne.s32.totalorder %s98, %s100
      %p104 = scmp.eq.s32.totalorder %s17, 0
      %p105 = por %p103, %p104
      %p106 = scmp.ne.s32.totalorder %s98, %s100
      %p107 = scmp.eq.s32.totalorder %s22, 1
      %p108 = por %p106, %p107
      %p109 = scmp.ne.s32.totalorder %s100, %s101
      %p110 = scmp.eq.s32.totalorder %s22, 0
      %p111 = por %p109, %p110
      %p112 = scmp.ne.s32.totalorder %s100, %s101
      %p113 = scmp.eq.s32.totalorder %s23, 1
      %p114 = por %p112, %p113
      %p116 = scmp.ne.s32.totalorder %s101, %s115
      %p117 = scmp.eq.s32.totalorder %s23, 0
      %p118 = por %p116, %p117
      %s119 = ssub.s32 %s17, %s24
      %p120 = scmp.eq.s32.totalorder %s119, 0
      %s122 = sadd.s32 %s121, 1
      %s123 = scalar_select %p120, %s121, %s122
      %p126 = pneg %p120
      %p127 = scmp.eq.s32.totalorder %s17, 1
      %p128 = por %p126, %p127
      %p129 = scmp.ne.s32.totalorder %s121, %s124
      %p130 = scmp.eq.s32.totalorder %s17, 0
      %p131 = por %p129, %p130
      %p132 = scmp.ne.s32.totalorder %s121, %s124
      %p133 = scmp.eq.s32.totalorder %s22, 1
      %p134 = por %p132, %p133
      %p135 = scmp.ne.s32.totalorder %s124, %s125
      %p136 = scmp.eq.s32.totalorder %s22, 0
      %p137 = por %p135, %p136
      %p138 = scmp.ne.s32.totalorder %s124, %s125
      %p139 = scmp.eq.s32.totalorder %s23, 1
      %p140 = por %p138, %p139
      %p142 = scmp.ne.s32.totalorder %s125, %s141
      %p143 = scmp.eq.s32.totalorder %s23, 0
      %p144 = por %p142, %p143
      %p145 = scmp.le.s32.totalorder 1, %s17
      %p146 = scmp.lt.s32.totalorder %s17, 3
      %p147 = pnand %p145, %p146
      %p148 = pneg %p147
      // Predicated region
      $region9: #{tpu_custom_call.1} parent=5 // pred_check
        _
      $region10: #{tpu_custom_call.1} parent=5 // pred_check_branch
        %150 = sbr.rel (%p147) target = $region12
      $region11: #{tpu_custom_call.1} parent=5 // pred_region
        %s151 = ssub.s32 %s17, 1
        // Predicated region
        $region13: #{tpu_custom_call.1} parent=11 // pred_check
          %p152 = pneg %p64
        $region14: #{tpu_custom_call.1} parent=11 // pred_check_branch
          %154 = sbr.rel (%p152) target = $region16
        $region15: #{tpu_custom_call.1} parent=11 // pred_region
          _
        $region16: #{tpu_custom_call.1} parent=11 // pred_fallthru
          _
        // Predicated region
        $region17: #{tpu_custom_call.1} parent=11 // pred_check
          %p155 = pneg %p111
        $region18: #{tpu_custom_call.1} parent=11 // pred_check_branch
          %157 = sbr.rel (%p155) target = $region20
        $region19: #{tpu_custom_call.1} parent=11 // pred_region
          _
        $region20: #{tpu_custom_call.1} parent=11 // pred_fallthru
          _
      $region12: #{tpu_custom_call.1} parent=5 // pred_fallthru
        _
      %p158 = scmp.lt.s32.totalorder %s17, 2
      // Predicated region
      $region21: #{tpu_custom_call.1} parent=5 // pred_check
        %p159 = pneg %p158
      $region22: #{tpu_custom_call.1} parent=5 // pred_check_branch
        %161 = sbr.rel (%p159) target = $region24
      $region23: #{tpu_custom_call.1} parent=5 // pred_region
        // Predicated region
        $region25: #{tpu_custom_call.1} parent=23 // pred_check
          %p162 = pneg %p37
        $region26: #{tpu_custom_call.1} parent=23 // pred_check_branch
          %164 = sbr.rel (%p162) target = $region28
        $region27: #{tpu_custom_call.1} parent=23 // pred_region
          %s165 = sand.u32 %s27, 1
          %s166 = scalar_lea.sflag [#allocation4], %s165
          %s167 = sand.u32 %s27, 1
          %s168 = smul.addr %s167, 16
          %s169 = scalar_lea.vmem [#allocation3], %s168
          %s170 = smul.u32 2, %s17
          %s171 = ssub.s32 3, %s170
          %p172 = scmp.lt.s32.totalorder %s171, 2
          %s173 = scalar_select %p172, %s171, 2
          %s174 = smul.u32 128, %s173
          %s176 = ssub.s32 256, %s174
          %177 = vsyncadd %s166, %s176
          %p178 = scmp.ne.s32.totalorder 0, %s174
          %s179 = smul.addr %s170, 128
          %s180 = scalar_lea.hbm %s0, %s179
          %s181 = smul.u32 8, %s173
          %s182 = sshll.u32 %s169, 4
          %s183 = int_to_ptr.vmem [resolvable:$true] %s182
          %s184 = sshll.u32 %s181, 4
          %188 = dma.hbm_to_vmem [thread:$0]  (%p178), %s180, %s184, %s183, %s166, 128, 128, 8
        $region28: #{tpu_custom_call.1} parent=23 // pred_fallthru
          _
        // Predicated region
        $region29: #{tpu_custom_call.1} parent=23 // pred_check
          %p189 = pneg %p84
        $region30: #{tpu_custom_call.1} parent=23 // pred_check_branch
          %191 = sbr.rel (%p189) target = $region32
        $region31: #{tpu_custom_call.1} parent=23 // pred_region
          %p192 = scmp.lt.s32.totalorder %s17, 1
          %s193 = scalar_select %p192, %s17, 1
          %s194 = scalar_lea.vmem %s2, %s193
        $region32: #{tpu_custom_call.1} parent=23 // pred_fallthru
          _
      $region24: #{tpu_custom_call.1} parent=5 // pred_fallthru
        _
      %p195 = scmp.le.s32.totalorder 1, %s17
      %p196 = scmp.lt.s32.totalorder %s17, 3
      %p197 = pnand %p195, %p196
      %p198 = pneg %p197
      // Predicated region
      $region33: #{tpu_custom_call.1} parent=5 // pred_check
        _
      $region34: #{tpu_custom_call.1} parent=5 // pred_check_branch
        %200 = sbr.rel (%p197) target = $region36
      $region35: #{tpu_custom_call.1} parent=5 // pred_region
        %s201 = ssub.s32 %s17, 1
        %s202 = sand.u32 %s30, 1
        %s203 = scalar_lea.sflag [#allocation4], %s202
        %s204 = sand.u32 %s30, 1
        %s205 = smul.addr %s204, 16
        %s206 = scalar_lea.vmem [#allocation3], %s205
        // Predicated region
        $region37: #{tpu_custom_call.1} parent=35 // pred_check
          %p207 = pneg %p43
        $region38: #{tpu_custom_call.1} parent=35 // pred_check_branch
          %209 = sbr.rel (%p207) target = $region40
        $region39: #{tpu_custom_call.1} parent=35 // pred_region
          %210 = dma.done %s203, 256
        $region40: #{tpu_custom_call.1} parent=35 // pred_fallthru
          _
        %s211 = sand.u32 %s30, 1
        %s212 = scalar_lea.sflag [#allocation4], %s211
        %s213 = sand.u32 %s30, 1
        %s214 = smul.addr %s213, 16
        %s215 = scalar_lea.vmem [#allocation3], %s214
        %p216 = pneg %p43
        %p217 = pneg %p40
        %p218 = pneg %p64
        %p219 = pneg %p61
        %p220 = scmp.lt.s32.totalorder %s22, 1
        %s221 = scalar_select %p220, %s22, 1
        %s222 = scalar_lea.vmem %s2, %s221
        %p223 = pneg %p90
        %p224 = pneg %p87
        %p225 = pneg %p111
        %p226 = pneg %p108
        %p227 = pneg %p137
        %p228 = pneg %p134
        %s229 = sand.u32 %s124, 1
        %s230 = scalar_lea.sflag [#allocation5], %s229
        %s231 = sand.u32 %s124, 1
        %s232 = scalar_lea.vmem [#allocation6], %s231
        %s233 = smul.u32 2, %s22
        %s234 = ssub.s32 3, %s233
        %p235 = scmp.lt.s32.totalorder %s234, 2
        %s236 = scalar_select %p235, %s234, 2
        %s237 = smul.u32 128, %s236
        %p238 = scmp.lt.s32.totalorder %s22, 1
        %s239 = scalar_select %p238, %s22, 1
        %s240 = scalar_lea.vmem %s2, %s239
        %v241 = vld [vmem:[%s206] sm:$0xff]
        %v242 = vld [vmem:[%s206 + $0x8] sm:$0xff]
        %v243 = vld [vmem:[%s1] sm:$0x1]
        %s244 = sld [smem:[#allocation2]]
        %v245 = vstv %s244
        %vm246 = vcmask 261120
        %v248 = vsel %vm246, %v243, 0
        %v251 = vsel %vm246, %v241, 0
        %v254 = vsel %vm246, %v242, 0
        %256 = vmatprep.subr.mxu0 0.0
        %257 = vmatpush1.xpose.msra.mxu0 %v251
        %258 = vmatprep.subr.mxu0 0.0
        %259 = vmatpush1.xpose.msra.mxu0 %v254
        %260 = vmatprep.subr.mxu0 0.0
        %261 = vmatpush1.xpose.msra.mxu0 0.0
        %262 = vmatprep.subr.mxu0 0.0
        %263 = vmatpush1.xpose.msra.mxu0 0.0
        %264 = vmatprep.subr.mxu0 0.0
        %265 = vmatpush1.xpose.msra.mxu0 0.0
        %266 = vmatprep.subr.mxu0 0.0
        %267 = vmatpush1.xpose.msra.mxu0 0.0
        %268 = vmatprep.subr.mxu0 0.0
        %269 = vmatpush1.xpose.msra.mxu0 0.0
        %270 = vmatprep.subr.mxu0 0.0
        %271 = vmatpush1.xpose.msra.mxu0 0.0
        %272 = vmatprep.subr.mxu0 0.0
        %273 = vmatpush1.xpose.msra.mxu0 0.0
        %274 = vmatprep.subr.mxu0 0.0
        %275 = vmatpush1.xpose.msra.mxu0 0.0
        %276 = vmatprep.subr.mxu0 0.0
        %277 = vmatpush1.xpose.msra.mxu0 0.0
        %278 = vmatprep.subr.mxu0 0.0
        %279 = vmatpush1.xpose.msra.mxu0 0.0
        %280 = vmatprep.subr.mxu0 0.0
        %281 = vmatpush1.xpose.msra.mxu0 0.0
        %282 = vmatprep.subr.mxu0 0.0
        %283 = vmatpush1.xpose.msra.mxu0 0.0
        %284 = vmatprep.subr.mxu0 0.0
        %285 = vmatpush1.xpose.msra.mxu0 0.0
        %286 = vmatprep.subr.mxu0 0.0
        %287 = vmatpush1.xpose.msra.mxu0 0.0
        %288 = vmatprep.subr.mxu0 0.0
        %289 = vmatpush1.xpose.msra.mxu0 0.0
        %290 = vmatprep.subr.mxu0 0.0
        %291 = vmatpush1.xpose.msra.mxu0 0.0
        %292 = vmatprep.subr.mxu0 0.0
        %293 = vmatpush1.xpose.msra.mxu0 0.0
        %294 = vmatprep.subr.mxu0 0.0
        %295 = vmatpush1.xpose.msra.mxu0 0.0
        %296 = vmatprep.subr.mxu0 0.0
        %297 = vmatpush1.xpose.msra.mxu0 0.0
        %298 = vmatprep.subr.mxu0 0.0
        %299 = vmatpush1.xpose.msra.mxu0 0.0
        %300 = vmatprep.subr.mxu0 0.0
        %301 = vmatpush1.xpose.msra.mxu0 0.0
        %302 = vmatprep.subr.mxu0 0.0
        %303 = vmatpush1.xpose.msra.mxu0 0.0
        %304 = vmatprep.subr.mxu0 0.0
        %305 = vmatpush1.xpose.msra.mxu0 0.0
        %306 = vmatprep.subr.mxu0 0.0
        %307 = vmatpush1.xpose.msra.mxu0 0.0
        %308 = vmatprep.subr.mxu0 0.0
        %309 = vmatpush1.xpose.msra.mxu0 0.0
        %310 = vmatprep.subr.mxu0 0.0
        %311 = vmatpush1.xpose.msra.mxu0 0.0
        %312 = vmatprep.subr.mxu0 0.0
        %313 = vmatpush1.xpose.msra.mxu0 0.0
        %314 = vmatprep.subr.mxu0 0.0
        %315 = vmatpush1.xpose.msra.mxu0 0.0
        %316 = vmatprep.subr.mxu0 0.0
        %317 = vmatpush1.xpose.msra.mxu0 0.0
        %318 = vmatprep.subr.mxu0 0.0
        %319 = vmatpush1.xpose.msra.mxu0 0.0
        %320 = vmatprep.mubr.f32.mxu0 0.0
        %321 = vmatmul.mubr.f32.gmra.mrb[0].mxu0 %v248
        %v322 = vpop.f32.mrb[0].mxu0
        %v323 = vadd.f32 %v245, %v322
        %v324 = vpop.f32.mrb[0].mxu0
        %325 = vdwg.mxu0
        %v326 = vld [vmem:[%s240] sm:$0x1]
        %vm327 = vcmp.gt.f32.partialorder %v326, 0.0
        %v328 = vlog2.pop %v326
        %v329 = vmul.f32 %v328, 0.6931472
        %v330 = vadd.f32 %v323, %v329
        %v331 = vsel %vm327, %v330, -inf
        %vm332 = vcmask 122880
        %333 = vst.msk [vmem:[%s232] sm:$0x1] %vm332, %v331
        %s334 = sand.u32 %s124, 1
        %s335 = scalar_lea.sflag [#allocation5], %s334
        %s336 = sand.u32 %s124, 1
        %s337 = scalar_lea.vmem [#allocation6], %s336
        // Predicated region
        $region41: #{tpu_custom_call.1} parent=35 // pred_check
          %p338 = pneg %p134
        $region42: #{tpu_custom_call.1} parent=35 // pred_check_branch
          %340 = sbr.rel (%p338) target = $region44
        $region43: #{tpu_custom_call.1} parent=35 // pred_region
          %s342 = ssub.s32 16, 16
          %343 = vsyncadd %s335, %s342
          %s344 = smul.addr %s22, 16
          %s345 = scalar_lea.hbm %s4, %s344
          %s347 = sshll.u32 %s337, 4
          %s348 = int_to_ptr.vmem [resolvable:$true] %s347
          %350 = dma.vmem_to_hbm [thread:$0]  %s348, 16, %s345, %s335
        $region44: #{tpu_custom_call.1} parent=35 // pred_fallthru
          _
      $region36: #{tpu_custom_call.1} parent=5 // pred_fallthru
        _
      %p351 = scmp.le.s32.totalorder 2, %s17
      // Predicated region
      $region45: #{tpu_custom_call.1} parent=5 // pred_check
        %p352 = pneg %p351
      $region46: #{tpu_custom_call.1} parent=5 // pred_check_branch
        %354 = sbr.rel (%p352) target = $region48
      $region47: #{tpu_custom_call.1} parent=5 // pred_region
        %s355 = ssub.s32 %s17, 2
        // Predicated region
        $region49: #{tpu_custom_call.1} parent=47 // pred_check
          %p356 = pneg %p140
        $region50: #{tpu_custom_call.1} parent=47 // pred_check_branch
          %358 = sbr.rel (%p356) target = $region52
        $region51: #{tpu_custom_call.1} parent=47 // pred_region
          %s359 = sand.u32 %s125, 1
          %s360 = scalar_lea.sflag [#allocation5], %s359
          %s361 = sand.u32 %s125, 1
          %s362 = scalar_lea.vmem [#allocation6], %s361
          %363 = dma.done %s360, 16
        $region52: #{tpu_custom_call.1} parent=47 // pred_fallthru
          _
      $region48: #{tpu_custom_call.1} parent=5 // pred_fallthru
        _
    $region6: #{tpu_custom_call.1} parent=1 // loop_footer
      %s21 = sadd.s32 1, %s17
    $region7: #{tpu_custom_call.1} parent=1 // loop_footer_branch
      %16 = sbr.rel target = $region3
    $region8: #{tpu_custom_call.1} parent=1 // loop_exit
      _
    %364 = vsyncpa [#allocation4], 1
    %s365 = scalar_lea.sflag [#allocation4], 1
    %366 = vsyncpa %s365, 1
    %367 = vsyncpa [#allocation5], 1
    %s368 = scalar_lea.sflag [#allocation5], 1
    %369 = vsyncpa %s368, 1

</llo_original>
